<compile_context>
chip_gen: v7x
topology: tpu7x:2x2x1
jax: 0.10.0
libtpu: 0.0.40
codegen_flags: <defaults>
</compile_context>

<pallas_src>
import jax
import jax.numpy as jnp
from jax import lax
from jax.experimental import pallas as pl
from jax.experimental.pallas import tpu as pltpu


def st_gcn_kernel(x_ref, a_ref, wcat_ref, bcat_ref, wtcn_ref, btcn_ref,
                  out_ref, xgcn_ref, x1_scr):
    # x_ref:    (C_in, N*V)     channel-major, batch folded onto lanes
    # a_ref:    (C_out, V, V)   a_eff = lc * sum_k A[k]  (precomputed, batch-invariant)
    # x1_scr:   (C_out, N, V)   VMEM scratch for the channel-batched adjacency operand
    c_out, b_t, v = x1_scr.shape

    # --- fused 1x1 convs (convlayer + residual), whole batch in one 2D MXU matmul ---
    xr = jnp.dot(wcat_ref[...], x_ref[...],
                 preferred_element_type=jnp.float32) + bcat_ref[...]      # (2*C_out, N*V)
    x1_2d = xr[:c_out]                                                    # gcn branch
    res_2d = xr[c_out:]                                                   # residual branch

    # --- bridge to channel-major 3D layout for the per-channel adjacency (relayout only) ---
    for n in range(b_t):                      # b_t is small and static
        x1_scr[:, n, :] = x1_2d[:, n * v:(n + 1) * v]

    # --- per-channel learned adjacency on the MXU: x2[c,n,w] = sum_v x1[c,n,v] * a_eff[c,v,w]
    x2 = lax.dot_general(
        x1_scr[...], a_ref[...],
        dimension_numbers=(((2,), (1,)), ((0,), (0,))),
        preferred_element_type=jnp.float32)                               # (C_out, N, V)

    # --- bn_relu_drop: ELU(alpha=1.0); dropout is identity at inference ---
    # expm1 computed with a cubic series near 0 to avoid cancellation (Mosaic-safe ops only).
    neg = jnp.minimum(x2, 0.0)
    em1 = jnp.where(neg > -0.0625,
                    neg * (1.0 + neg * (0.5 + neg * (1.0 / 6.0))),
                    jnp.exp(neg) - 1.0)
    x1_scr[...] = jnp.where(x2 > 0.0, x2, em1)                            # reuse scratch for x_gcn

    # back to the lane-dense 2D layout; this is also the x_gcn output
    for n in range(b_t):
        xgcn_ref[:, n * v:(n + 1) * v] = x1_scr[:, n, :]

    # --- tcn: 1x1 conv (out -> out) with bias, then residual add ---
    x3 = jnp.dot(wtcn_ref[...], xgcn_ref[...],
                 preferred_element_type=jnp.float32) + btcn_ref[...]      # (C_out, N*V)
    out_ref[...] = x3 + res_2d


def st_gcn_forward(x_nchw, A, params):
    """x_nchw: (N, C_in, 1, V) float32;  A: (K, V, V) float32."""
    N, C_in, _, V = x_nchw.shape
    C_out = params["w_conv"].shape[0]
    BV = N * V

    # batch-invariant adjacency math hoisted out of the kernel (was recomputed per grid step)
    a_eff = params["lc"] * jnp.sum(A, axis=0)[None, :, :]                  # (C_out, V, V)
    # fuse the two 1x1 convs that share the same input
    w_cat = jnp.concatenate([params["w_conv"], params["w_res"]], axis=0)   # (2*C_out, C_in)
    b_cat = jnp.concatenate([params["b_conv"], params["b_res"]], axis=0)   # (2*C_out, 1)
    # channel-major with batch folded onto lanes: x2d[c, n*V + v] = x[n, c, 0, v]
    x2d = jnp.transpose(x_nchw[:, :, 0, :], (1, 0, 2)).reshape(C_in, BV)

    def full(shape):
        return pl.BlockSpec(shape, lambda b, _nd=len(shape): (0,) * _nd)

    out2d, xg2d = pl.pallas_call(
        st_gcn_kernel,
        out_shape=(jax.ShapeDtypeStruct((C_out, BV), jnp.float32),
                   jax.ShapeDtypeStruct((C_out, BV), jnp.float32)),
        grid_spec=pltpu.PrefetchScalarGridSpec(
            num_scalar_prefetch=0,
            grid=(1,),   # whole batch fused into one lane-dense tile; tile over batch/W at scale
            in_specs=[
                full((C_in, BV)),           # x (channel-major, batch on lanes)
                full((C_out, V, V)),        # a_eff
                full((2 * C_out, C_in)),    # fused conv+residual weight
                full((2 * C_out, 1)),       # fused conv+residual bias
                full((C_out, C_out)),       # tcn weight
                full((C_out, 1)),           # tcn bias
            ],
            out_specs=[
                full((C_out, BV)),          # output (lane-dense)
                full((C_out, BV)),          # x_gcn (lane-dense)
            ],
            scratch_shapes=[pltpu.VMEM((C_out, N, V), jnp.float32)],
        ),
        compiler_params=pltpu.CompilerParams(dimension_semantics=("parallel",)),
    )(x2d, a_eff, w_cat, b_cat, params["w_tcn"], params["b_tcn"])

    def to_nchw(y2d):
        return jnp.transpose(y2d.reshape(C_out, N, V), (1, 0, 2))[:, :, None, :]

    # module also returns x_gcn and A unchanged
    return to_nchw(out2d), to_nchw(xg2d), A


def ref_forward(x_nchw, A, p):
    """Plain-JAX reference of the same forward semantics (eval mode)."""
    hp = lax.Precision.HIGHEST
    xs = x_nchw[:, :, 0, :]
    res = jnp.einsum("oc,ncv->nov", p["w_res"], xs, precision=hp) + p["b_res"][None]
    x1 = jnp.einsum("oc,ncv->nov", p["w_conv"], xs, precision=hp) + p["b_conv"][None]
    a = p["lc"] * jnp.sum(A, axis=0)[None]
    x2 = jnp.einsum("ncv,cvw->ncw", x1, a, precision=hp)
    xg = jax.nn.elu(x2, alpha=1.0)
    x3 = jnp.einsum("oc,ncv->nov", p["w_tcn"], xg, precision=hp) + p["b_tcn"][None]
    return (x3 + res)[:, :, None, :], xg[:, :, None, :], A


if __name__ == "__main__":
    N, C_in, C_out, V, K = 2, 4, 8, 16, 6   # V == num_nodes == T*V of the module

    key = jax.random.PRNGKey(0)
    keys = jax.random.split(key, 10)
    x = jax.random.normal(keys[0], (N, C_in, 1, V), dtype=jnp.float32)
    A = jax.random.normal(keys[1], (K, V, V), dtype=jnp.float32)

    params = {
        "lc":     jax.random.normal(keys[2], (C_out, V, V), dtype=jnp.float32),
        "w_conv": jax.random.normal(keys[3], (C_out, C_in), dtype=jnp.float32) * 0.1,
        "b_conv": jax.random.normal(keys[4], (C_out, 1), dtype=jnp.float32) * 0.1,
        "w_res":  jax.random.normal(keys[5], (C_out, C_in), dtype=jnp.float32) * 0.1,
        "b_res":  jax.random.normal(keys[6], (C_out, 1), dtype=jnp.float32) * 0.1,
        "w_tcn":  jax.random.normal(keys[7], (C_out, C_out), dtype=jnp.float32) * 0.1,
        "b_tcn":  jax.random.normal(keys[8], (C_out, 1), dtype=jnp.float32) * 0.1,
    }

    out, x_gcn, A_out = st_gcn_forward(x, A, params)
    jax.block_until_ready(out)
    jax.block_until_ready(x_gcn)

    ref_out, ref_xgcn, _ = ref_forward(x, A, params)
    # Kernel matmuls run on the MXU (f32 pass decomposition) vs HIGHEST-precision XLA reference,
    # and ELU uses an expm1-accurate approximation -> compare with a small relative tolerance.
    assert jnp.allclose(out, ref_out, atol=1e-4, rtol=1e-3), "output mismatch"
    assert jnp.allclose(x_gcn, ref_xgcn, atol=1e-4, rtol=1e-3), "x_gcn mismatch"

    print("KERNEL_OK")
</pallas_src>

<mosaic_0001>
module attributes {stable_mosaic.version = 11 : i64} {
  func.func @st_gcn_kernel(%arg0: i32, %arg1: memref<4x32xf32, #tpu.memory_space<vmem>>, %arg2: memref<8x16x16xf32, #tpu.memory_space<vmem>>, %arg3: memref<16x4xf32, #tpu.memory_space<vmem>>, %arg4: memref<16x1xf32, #tpu.memory_space<vmem>>, %arg5: memref<8x8xf32, #tpu.memory_space<vmem>>, %arg6: memref<8x1xf32, #tpu.memory_space<vmem>>, %arg7: memref<8x32xf32, #tpu.memory_space<vmem>>, %arg8: memref<8x32xf32, #tpu.memory_space<vmem>>, %arg9: memref<8x2x16xf32, #tpu.memory_space<vmem>>) attributes {dimension_semantics = [#tpu.dimension_semantics<parallel>], iteration_bounds = array<i64: 1>, scalar_prefetch = 0 : i64, scratch_operands = 1 : i64, tpu.core_type = #tpu.core_type<tc>, window_params = [{pipeline_mode = #tpu.pipeline_mode<synchronous>, transform_indices = @transform_0, window_bounds = array<i64: 4, 32>}, {pipeline_mode = #tpu.pipeline_mode<synchronous>, transform_indices = @transform_1, window_bounds = array<i64: 8, 16, 16>}, {pipeline_mode = #tpu.pipeline_mode<synchronous>, transform_indices = @transform_2, window_bounds = array<i64: 16, 4>}, {pipeline_mode = #tpu.pipeline_mode<synchronous>, transform_indices = @transform_3, window_bounds = array<i64: 16, 1>}, {pipeline_mode = #tpu.pipeline_mode<synchronous>, transform_indices = @transform_4, window_bounds = array<i64: 8, 8>}, {pipeline_mode = #tpu.pipeline_mode<synchronous>, transform_indices = @transform_5, window_bounds = array<i64: 8, 1>}, {pipeline_mode = #tpu.pipeline_mode<synchronous>, transform_indices = @transform_6, window_bounds = array<i64: 8, 32>}, {pipeline_mode = #tpu.pipeline_mode<synchronous>, transform_indices = @transform_7, window_bounds = array<i64: 8, 32>}]} {
    %c0 = arith.constant 0 : index
    %c0_0 = arith.constant 0 : index
    %0 = vector.load %arg3[%c0, %c0_0] : memref<16x4xf32, #tpu.memory_space<vmem>>, vector<16x4xf32>
    %c0_1 = arith.constant 0 : index
    %c0_2 = arith.constant 0 : index
    %1 = vector.load %arg1[%c0_1, %c0_2] : memref<4x32xf32, #tpu.memory_space<vmem>>, vector<4x32xf32>
    %cst = arith.constant dense<0.000000e+00> : vector<16x32xf32>
    %2 = tpu.matmul %0, %1, %cst {dimension_numbers = #tpu.dot_dimension_numbers<[1], [0], [0], [1], [0, 0, 1, 1], [], []>} : vector<16x4xf32>, vector<4x32xf32>, vector<16x32xf32> -> vector<16x32xf32>
    %c0_3 = arith.constant 0 : index
    %c0_4 = arith.constant 0 : index
    %3 = vector.load %arg4[%c0_3, %c0_4] : memref<16x1xf32, #tpu.memory_space<vmem>>, vector<16x1xf32>
    %4 = vector.broadcast %3 : vector<16x1xf32> to vector<16x32xf32>
    %5 = arith.addf %2, %4 : vector<16x32xf32>
    %6 = vector.extract_strided_slice %5 {offsets = [0, 0], sizes = [8, 32], strides = [1, 1]} : vector<16x32xf32> to vector<8x32xf32>
    %7 = vector.extract_strided_slice %5 {offsets = [8, 0], sizes = [8, 32], strides = [1, 1]} : vector<16x32xf32> to vector<8x32xf32>
    %8 = vector.extract_strided_slice %6 {offsets = [0, 0], sizes = [8, 16], strides = [1, 1]} : vector<8x32xf32> to vector<8x16xf32>
    %c0_5 = arith.constant 0 : index
    %c0_6 = arith.constant 0 : index
    %c0_7 = arith.constant 0 : index
    %9 = vector.load %arg9[%c0_5, %c0_6, %c0_7] : memref<8x2x16xf32, #tpu.memory_space<vmem>>, vector<8x1x16xf32>
    %10 = vector.shape_cast %9 : vector<8x1x16xf32> to vector<8x16xf32>
    %11 = vector.shape_cast %8 : vector<8x16xf32> to vector<8x1x16xf32>
    tpu.vector_store %arg9[%c0_5, %c0_6, %c0_7], %11 {strides = array<i32>} : memref<8x2x16xf32, #tpu.memory_space<vmem>>, vector<8x1x16xf32>,
    %12 = vector.extract_strided_slice %6 {offsets = [0, 16], sizes = [8, 16], strides = [1, 1]} : vector<8x32xf32> to vector<8x16xf32>
    %c0_8 = arith.constant 0 : index
    %c1 = arith.constant 1 : index
    %c0_9 = arith.constant 0 : index
    %13 = vector.load %arg9[%c0_8, %c1, %c0_9] : memref<8x2x16xf32, #tpu.memory_space<vmem>>, vector<8x1x16xf32>
    %14 = vector.shape_cast %13 : vector<8x1x16xf32> to vector<8x16xf32>
    %15 = vector.shape_cast %12 : vector<8x16xf32> to vector<8x1x16xf32>
    tpu.vector_store %arg9[%c0_8, %c1, %c0_9], %15 {strides = array<i32>} : memref<8x2x16xf32, #tpu.memory_space<vmem>>, vector<8x1x16xf32>,
    %c0_10 = arith.constant 0 : index
    %c0_11 = arith.constant 0 : index
    %c0_12 = arith.constant 0 : index
    %16 = vector.load %arg9[%c0_10, %c0_11, %c0_12] : memref<8x2x16xf32, #tpu.memory_space<vmem>>, vector<8x2x16xf32>
    %c0_13 = arith.constant 0 : index
    %c0_14 = arith.constant 0 : index
    %c0_15 = arith.constant 0 : index
    %17 = vector.load %arg2[%c0_13, %c0_14, %c0_15] : memref<8x16x16xf32, #tpu.memory_space<vmem>>, vector<8x16x16xf32>
    %cst_16 = arith.constant dense<0.000000e+00> : vector<8x2x16xf32>
    %18 = tpu.matmul %16, %17, %cst_16 {dimension_numbers = #tpu.dot_dimension_numbers<[2], [1], [1], [2], [0, 0, 0, 1, 1, 2], [0], [0]>} : vector<8x2x16xf32>, vector<8x16x16xf32>, vector<8x2x16xf32> -> vector<8x2x16xf32>
    %cst_17 = arith.constant 0.000000e+00 : f32
    %19 = vector.broadcast %cst_17 : f32 to vector<8x2x16xf32>
    %20 = arith.minimumf %18, %19 : vector<8x2x16xf32>
    %cst_18 = arith.constant -6.250000e-02 : f32
    %21 = vector.broadcast %cst_18 : f32 to vector<8x2x16xf32>
    %22 = arith.cmpf ogt, %20, %21 : vector<8x2x16xf32>
    %cst_19 = arith.constant 0.166666672 : f32
    %23 = vector.broadcast %cst_19 : f32 to vector<8x2x16xf32>
    %24 = arith.mulf %20, %23 : vector<8x2x16xf32>
    %cst_20 = arith.constant 5.000000e-01 : f32
    %25 = vector.broadcast %cst_20 : f32 to vector<8x2x16xf32>
    %26 = arith.addf %25, %24 : vector<8x2x16xf32>
    %27 = arith.mulf %20, %26 : vector<8x2x16xf32>
    %cst_21 = arith.constant 1.000000e+00 : f32
    %28 = vector.broadcast %cst_21 : f32 to vector<8x2x16xf32>
    %29 = arith.addf %28, %27 : vector<8x2x16xf32>
    %30 = arith.mulf %20, %29 : vector<8x2x16xf32>
    %31 = math.exp %20 : vector<8x2x16xf32>
    %cst_22 = arith.constant 1.000000e+00 : f32
    %32 = vector.broadcast %cst_22 : f32 to vector<8x2x16xf32>
    %33 = arith.subf %31, %32 : vector<8x2x16xf32>
    %34 = arith.select %22, %30, %33 : vector<8x2x16xi1>, vector<8x2x16xf32>
    %cst_23 = arith.constant 0.000000e+00 : f32
    %35 = vector.broadcast %cst_23 : f32 to vector<8x2x16xf32>
    %36 = arith.cmpf ogt, %18, %35 : vector<8x2x16xf32>
    %37 = arith.select %36, %18, %34 : vector<8x2x16xi1>, vector<8x2x16xf32>
    %c0_24 = arith.constant 0 : index
    %c0_25 = arith.constant 0 : index
    %c0_26 = arith.constant 0 : index
    %38 = vector.load %arg9[%c0_24, %c0_25, %c0_26] : memref<8x2x16xf32, #tpu.memory_space<vmem>>, vector<8x2x16xf32>
    tpu.vector_store %arg9[%c0_24, %c0_25, %c0_26], %37 {strides = array<i32>} : memref<8x2x16xf32, #tpu.memory_space<vmem>>, vector<8x2x16xf32>,
    %c0_27 = arith.constant 0 : index
    %c0_28 = arith.constant 0 : index
    %c0_29 = arith.constant 0 : index
    %39 = vector.load %arg9[%c0_27, %c0_28, %c0_29] : memref<8x2x16xf32, #tpu.memory_space<vmem>>, vector<8x1x16xf32>
    %40 = vector.shape_cast %39 : vector<8x1x16xf32> to vector<8x16xf32>
    %c0_30 = arith.constant 0 : index
    %c0_31 = arith.constant 0 : index
    %41 = vector.load %arg8[%c0_30, %c0_31] : memref<8x32xf32, #tpu.memory_space<vmem>>, vector<8x16xf32>
    tpu.vector_store %arg8[%c0_30, %c0_31], %40 {strides = array<i32>} : memref<8x32xf32, #tpu.memory_space<vmem>>, vector<8x16xf32>,
    %c0_32 = arith.constant 0 : index
    %c1_33 = arith.constant 1 : index
    %c0_34 = arith.constant 0 : index
    %42 = vector.load %arg9[%c0_32, %c1_33, %c0_34] : memref<8x2x16xf32, #tpu.memory_space<vmem>>, vector<8x1x16xf32>
    %43 = vector.shape_cast %42 : vector<8x1x16xf32> to vector<8x16xf32>
    %c0_35 = arith.constant 0 : index
    %c16 = arith.constant 16 : index
    %44 = vector.load %arg8[%c0_35, %c16] : memref<8x32xf32, #tpu.memory_space<vmem>>, vector<8x16xf32>
    tpu.vector_store %arg8[%c0_35, %c16], %43 {strides = array<i32>} : memref<8x32xf32, #tpu.memory_space<vmem>>, vector<8x16xf32>,
    %c0_36 = arith.constant 0 : index
    %c0_37 = arith.constant 0 : index
    %45 = vector.load %arg5[%c0_36, %c0_37] : memref<8x8xf32, #tpu.memory_space<vmem>>, vector<8x8xf32>
    %c0_38 = arith.constant 0 : index
    %c0_39 = arith.constant 0 : index
    %46 = vector.load %arg8[%c0_38, %c0_39] : memref<8x32xf32, #tpu.memory_space<vmem>>, vector<8x32xf32>
    %cst_40 = arith.constant dense<0.000000e+00> : vector<8x32xf32>
    %47 = tpu.matmul %45, %46, %cst_40 {dimension_numbers = #tpu.dot_dimension_numbers<[1], [0], [0], [1], [0, 0, 1, 1], [], []>} : vector<8x8xf32>, vector<8x32xf32>, vector<8x32xf32> -> vector<8x32xf32>
    %c0_41 = arith.constant 0 : index
    %c0_42 = arith.constant 0 : index
    %48 = vector.load %arg6[%c0_41, %c0_42] : memref<8x1xf32, #tpu.memory_space<vmem>>, vector<8x1xf32>
    %49 = vector.broadcast %48 : vector<8x1xf32> to vector<8x32xf32>
    %50 = arith.addf %47, %49 : vector<8x32xf32>
    %51 = arith.addf %50, %7 : vector<8x32xf32>
    %c0_43 = arith.constant 0 : index
    %c0_44 = arith.constant 0 : index
    %52 = vector.load %arg7[%c0_43, %c0_44] : memref<8x32xf32, #tpu.memory_space<vmem>>, vector<8x32xf32>
    tpu.vector_store %arg7[%c0_43, %c0_44], %51 {strides = array<i32>} : memref<8x32xf32, #tpu.memory_space<vmem>>, vector<8x32xf32>,
    return
  }
  func.func @transform_0(%arg0: i32) -> (i32, i32) {
    %c0_i32 = arith.constant 0 : i32
    %c0_i32_0 = arith.constant 0 : i32
    %c0_i32_1 = arith.constant 0 : i32
    return %c0_i32, %c0_i32_0 : i32, i32
  }
  func.func @transform_1(%arg0: i32) -> (i32, i32, i32) {
    %c0_i32 = arith.constant 0 : i32
    %c0_i32_0 = arith.constant 0 : i32
    %c0_i32_1 = arith.constant 0 : i32
    %c0_i32_2 = arith.constant 0 : i32
    return %c0_i32, %c0_i32_0, %c0_i32_1 : i32, i32, i32
  }
  func.func @transform_2(%arg0: i32) -> (i32, i32) {
    %c0_i32 = arith.constant 0 : i32
    %c0_i32_0 = arith.constant 0 : i32
    %c0_i32_1 = arith.constant 0 : i32
    return %c0_i32, %c0_i32_0 : i32, i32
  }
  func.func @transform_3(%arg0: i32) -> (i32, i32) {
    %c0_i32 = arith.constant 0 : i32
    %c0_i32_0 = arith.constant 0 : i32
    %c0_i32_1 = arith.constant 0 : i32
    return %c0_i32, %c0_i32_0 : i32, i32
  }
  func.func @transform_4(%arg0: i32) -> (i32, i32) {
    %c0_i32 = arith.constant 0 : i32
    %c0_i32_0 = arith.constant 0 : i32
    %c0_i32_1 = arith.constant 0 : i32
    return %c0_i32, %c0_i32_0 : i32, i32
  }
  func.func @transform_5(%arg0: i32) -> (i32, i32) {
    %c0_i32 = arith.constant 0 : i32
    %c0_i32_0 = arith.constant 0 : i32
    %c0_i32_1 = arith.constant 0 : i32
    return %c0_i32, %c0_i32_0 : i32, i32
  }
  func.func @transform_6(%arg0: i32) -> (i32, i32) {
    %c0_i32 = arith.constant 0 : i32
    %c0_i32_0 = arith.constant 0 : i32
    %c0_i32_1 = arith.constant 0 : i32
    return %c0_i32, %c0_i32_0 : i32, i32
  }
  func.func @transform_7(%arg0: i32) -> (i32, i32) {
    %c0_i32 = arith.constant 0 : i32
    %c0_i32_0 = arith.constant 0 : i32
    %c0_i32_1 = arith.constant 0 : i32
    return %c0_i32, %c0_i32_0 : i32, i32
  }
}

</mosaic_0001>

<llo_original>
// kernel: tpu_custom_call.1
$region0: #{tpu_custom_call.1}
  #allocation0 [shape = 'u32[]', space=smem, size = 0x4, offset = 0x4, fixed_abs, tag = 'smem constant byte address 0x4 - core index']
  #allocation1 [shape = 'u32[144,128]{1,0:T(1,128)}', space=vmem, size = 0x12000, scoped, tag = 'internal scratch']
  #allocation2 [shape = 'f32[8,2,16]{2,1,0:T(2,128)}', space=vmem, size = 0x2000, scoped, tag = 'scratch operand']
  %s0 = inlined_call_operand.vmem [shape: f32[4,32], index: 0, kind: input, shape index: {}]
  %s1 = inlined_call_operand.hbm [shape: f32[8,16,16], index: 1, kind: input, shape index: {}]
  %s2 = inlined_call_operand.vmem [shape: f32[16,4], index: 2, kind: input, shape index: {}]
  %s3 = inlined_call_operand.vmem [shape: f32[16,1], index: 3, kind: input, shape index: {}]
  %s4 = inlined_call_operand.vmem [shape: f32[8,8], index: 4, kind: input, shape index: {}]
  %s5 = inlined_call_operand.vmem [shape: f32[8,1], index: 5, kind: input, shape index: {}]
  %s6 = inlined_call_operand.hbm [shape: f32[8,32], index: 6, kind: output, shape index: {0}]
  %s7 = inlined_call_operand.hbm [shape: f32[8,32], index: 7, kind: output, shape index: {1}]
  %8 = xla_tuple %s6, %s7
  %s9 = sld [smem:[#allocation0]]
  $region46: #{tpu_custom_call.1} parent=0
    _
  %s11 = ssub.s32 1, %s9
  %s12 = scalar_select 0, %s11, %s9
  $region1: #{tpu_custom_call.1} parent=0
    #allocation3 [shape = 'u8[65536]{0}', space=vmem, size = 0x10000, scoped, tag = 'input window, operand 1, single buffered']
    #allocation4 [shape = 's32[1]{0}', space=sflag, size = 0x4, scoped, tag = 'scoped memory for tpu_custom_call.1']
    #allocation5 [shape = 's32[1]{0}', space=sflag, size = 0x4, scoped, tag = 'scoped memory for tpu_custom_call.1']
    #allocation6 [shape = 'u8[4096]{0}', space=vmem, size = 0x1000, scoped, tag = 'output window, operand 0, single buffered']
    #allocation7 [shape = 'u8[4096]{0}', space=vmem, size = 0x1000, scoped, tag = 'output window, operand 1, single buffered']
    #allocation8 [shape = 's32[1]{0}', space=sflag, size = 0x4, scoped, tag = 'scoped memory for tpu_custom_call.1']
    %13 = vsyncpa [#allocation4], 0
    %14 = vsyncpa [#allocation5], 0
    %15 = vsyncpa [#allocation8], 0
    // Predicated region
    $region2: #{tpu_custom_call.1} parent=1 // pred_check
      _
    $region3: #{tpu_custom_call.1} parent=1 // pred_check_branch
      %17 = sbr.rel (0) target = $region5
    $region4: #{tpu_custom_call.1} parent=1 // pred_region
      _
    $region5: #{tpu_custom_call.1} parent=1 // pred_fallthru
      _
    // Predicated region
    $region6: #{tpu_custom_call.1} parent=1 // pred_check
      _
    $region7: #{tpu_custom_call.1} parent=1 // pred_check_branch
      %19 = sbr.rel (0) target = $region9
    $region8: #{tpu_custom_call.1} parent=1 // pred_region
      %s21 = ssub.s32 2048, 2048
      %22 = vsyncadd [#allocation4], %s21
      %s23 = sshll.u32 [#allocation3], 4
      %s24 = int_to_ptr.vmem [resolvable:$true] %s23
      %29 = dma.hbm_to_vmem [thread:$0]  %s1, 2048, %s24, [#allocation4], 128, 128, 8
    $region9: #{tpu_custom_call.1} parent=1 // pred_fallthru
      _
    // Predicated region
    $region10: #{tpu_custom_call.1} parent=1 // pred_check
      _
    $region11: #{tpu_custom_call.1} parent=1 // pred_check_branch
      %31 = sbr.rel (0) target = $region13
    $region12: #{tpu_custom_call.1} parent=1 // pred_region
      _
    $region13: #{tpu_custom_call.1} parent=1 // pred_fallthru
      _
    // Predicated region
    $region14: #{tpu_custom_call.1} parent=1 // pred_check
      _
    $region15: #{tpu_custom_call.1} parent=1 // pred_check_branch
      %33 = sbr.rel (0) target = $region17
    $region16: #{tpu_custom_call.1} parent=1 // pred_region
      _
    $region17: #{tpu_custom_call.1} parent=1 // pred_fallthru
      _
    // Predicated region
    $region18: #{tpu_custom_call.1} parent=1 // pred_check
      _
    $region19: #{tpu_custom_call.1} parent=1 // pred_check_branch
      %35 = sbr.rel (0) target = $region21
    $region20: #{tpu_custom_call.1} parent=1 // pred_region
      _
    $region21: #{tpu_custom_call.1} parent=1 // pred_fallthru
      _
    // Predicated region
    $region22: #{tpu_custom_call.1} parent=1 // pred_check
      _
    $region23: #{tpu_custom_call.1} parent=1 // pred_check_branch
      %37 = sbr.rel (0) target = $region25
    $region24: #{tpu_custom_call.1} parent=1 // pred_region
      _
    $region25: #{tpu_custom_call.1} parent=1 // pred_fallthru
      _
    // Predicated region
    $region26: #{tpu_custom_call.1} parent=1 // pred_check
      _
    $region27: #{tpu_custom_call.1} parent=1 // pred_check_branch
      %39 = sbr.rel (0) target = $region29
    $region28: #{tpu_custom_call.1} parent=1 // pred_region
      %40 = dma.done [#allocation4], 2048
    $region29: #{tpu_custom_call.1} parent=1 // pred_fallthru
      _
    %v41 = vld [vmem:[%s2] sm:$0xff]
    %v42 = vld [vmem:[%s2 + $0x8] sm:$0xff]
    %v43 = vld [vmem:[%s0] sm:$0xf]
    %v44 = vld [vmem:[%s3] sm:$0xff]
    %v45 = vld [vmem:[%s3 + $0x8] sm:$0xff]
    %47 = vset.pattern.permute.xlu0 0
    %48 = vperm.xlu0 %47, %v44
    %v49 = vpop.permute.xlu0 %48
    %52 = vset.pattern.permute.xlu0 0
    %53 = vperm.xlu0 %52, %v45
    %v54 = vpop.permute.xlu0 %53
    %vm56 = vcmask 31744
    %v58 = vsel %vm56, %v41, 0
    %v61 = vsel %vm56, %v42, 0
    %vm63 = vcmask 1043456
    %v65 = vsel %vm63, %v43, 0
    %67 = vmatprep.subr.mxu0 0.0
    %68 = vmatpush1.msra.mxu0 %v65
    %69 = vmatprep.subr.mxu0 0.0
    %70 = vmatpush1.msra.mxu0 0.0
    %71 = vmatprep.subr.mxu0 0.0
    %72 = vmatpush1.msra.mxu0 0.0
    %73 = vmatprep.subr.mxu0 0.0
    %74 = vmatpush1.msra.mxu0 0.0
    %75 = vmatprep.subr.mxu0 0.0
    %76 = vmatpush1.msra.mxu0 0.0
    %77 = vmatprep.subr.mxu0 0.0
    %78 = vmatpush1.msra.mxu0 0.0
    %79 = vmatprep.subr.mxu0 0.0
    %80 = vmatpush1.msra.mxu0 0.0
    %81 = vmatprep.subr.mxu0 0.0
    %82 = vmatpush1.msra.mxu0 0.0
    %83 = vmatprep.subr.mxu0 0.0
    %84 = vmatpush1.msra.mxu0 0.0
    %85 = vmatprep.subr.mxu0 0.0
    %86 = vmatpush1.msra.mxu0 0.0
    %87 = vmatprep.subr.mxu0 0.0
    %88 = vmatpush1.msra.mxu0 0.0
    %89 = vmatprep.subr.mxu0 0.0
    %90 = vmatpush1.msra.mxu0 0.0
    %91 = vmatprep.subr.mxu0 0.0
    %92 = vmatpush1.msra.mxu0 0.0
    %93 = vmatprep.subr.mxu0 0.0
    %94 = vmatpush1.msra.mxu0 0.0
    %95 = vmatprep.subr.mxu0 0.0
    %96 = vmatpush1.msra.mxu0 0.0
    %97 = vmatprep.subr.mxu0 0.0
    %98 = vmatpush1.msra.mxu0 0.0
    %99 = vmatprep.subr.mxu0 0.0
    %100 = vmatpush1.msra.mxu0 0.0
    %101 = vmatprep.subr.mxu0 0.0
    %102 = vmatpush1.msra.mxu0 0.0
    %103 = vmatprep.subr.mxu0 0.0
    %104 = vmatpush1.msra.mxu0 0.0
    %105 = vmatprep.subr.mxu0 0.0
    %106 = vmatpush1.msra.mxu0 0.0
    %107 = vmatprep.subr.mxu0 0.0
    %108 = vmatpush1.msra.mxu0 0.0
    %109 = vmatprep.subr.mxu0 0.0
    %110 = vmatpush1.msra.mxu0 0.0
    %111 = vmatprep.subr.mxu0 0.0
    %112 = vmatpush1.msra.mxu0 0.0
    %113 = vmatprep.subr.mxu0 0.0
    %114 = vmatpush1.msra.mxu0 0.0
    %115 = vmatprep.subr.mxu0 0.0
    %116 = vmatpush1.msra.mxu0 0.0
    %117 = vmatprep.subr.mxu0 0.0
    %118 = vmatpush1.msra.mxu0 0.0
    %119 = vmatprep.subr.mxu0 0.0
    %120 = vmatpush1.msra.mxu0 0.0
    %121 = vmatprep.subr.mxu0 0.0
    %122 = vmatpush1.msra.mxu0 0.0
    %123 = vmatprep.subr.mxu0 0.0
    %124 = vmatpush1.msra.mxu0 0.0
    %125 = vmatprep.subr.mxu0 0.0
    %126 = vmatpush1.msra.mxu0 0.0
    %127 = vmatprep.subr.mxu0 0.0
    %128 = vmatpush1.msra.mxu0 0.0
    %129 = vmatprep.subr.mxu0 0.0
    %130 = vmatpush1.msra.mxu0 0.0
    %131 = vmatprep.mubr.f32.mxu0 0.0
    %132 = vmatmul.mubr.f32.gmra.mrb[0].mxu0 %v58
    %v133 = vpop.f32.mrb[0].mxu0
    %v134 = vadd.f32 %v49, %v133
    %v135 = vpop.f32.mrb[0].mxu0
    %136 = vmatprep.mubr.f32.mxu0 0.0
    %137 = vmatmul.mubr.f32.gmra.mrb[0].mxu0 %v61
    %v138 = vpop.f32.mrb[0].mxu0
    %v139 = vadd.f32 %v54, %v138
    %v140 = vpop.f32.mrb[0].mxu0
    %141 = vdwg.mxu0
    %v143 = vcombine.high %v134, %v134
    %v145 = vunpack.c.l.s4 1966171168
    %v146 = vunpack.c.0.s8 %v145
    %v147 = vlaneseq
    %v148 = vshrl.u32 %v147, 7
    %v149 = vsub.s32 %v146, %v148
    %v150 = vrot.slane %v134, %v149
    %v152 = vunpack.c.l.s4 1966171168
    %v153 = vunpack.c.0.s8 %v152
    %v154 = vlaneseq
    %v155 = vshrl.u32 %v154, 7
    %v156 = vsub.s32 %v153, %v155
    %v157 = vrot.slane %v143, %v156
    %v158 = vcombine.high %v150, %v150
    %v159 = vcombine.high %v157, %v157
    %v161 = vunpack.c.l.s4 1966171168
    %v162 = vunpack.c.0.s8 %v161
    %v163 = vlaneseq
    %v164 = vshrl.u32 %v163, 7
    %v165 = vsub.s32 %v162, %v164
    %v166 = vrot.slane %v150, %v165
    %v168 = vunpack.c.l.s4 1966171168
    %v169 = vunpack.c.0.s8 %v168
    %v170 = vlaneseq
    %v171 = vshrl.u32 %v170, 7
    %v172 = vsub.s32 %v169, %v171
    %v173 = vrot.slane %v157, %v172
    %v175 = vunpack.c.l.s4 1966171168
    %v176 = vunpack.c.0.s8 %v175
    %v177 = vlaneseq
    %v178 = vshrl.u32 %v177, 7
    %v179 = vsub.s32 %v176, %v178
    %v180 = vrot.slane %v158, %v179
    %v182 = vunpack.c.l.s4 1966171168
    %v183 = vunpack.c.0.s8 %v182
    %v184 = vlaneseq
    %v185 = vshrl.u32 %v184, 7
    %v186 = vsub.s32 %v183, %v185
    %v187 = vrot.slane %v159, %v186
    %v188 = vcombine.high %v166, %v166
    %v189 = vcombine.high %v173, %v173
    %v190 = vcombine.high %v180, %v180
    %v191 = vcombine.high %v187, %v187
    %vm200 = vcmask 122880
    %201 = vst.msk [vmem:[#allocation2] sm:$0x1] %vm200, %v166
    %202 = vst.msk [vmem:[#allocation2 + $0x2] sm:$0x1] %vm200, %v180
    %203 = vst.msk [vmem:[#allocation2 + $0x4] sm:$0x1] %vm200, %v188
    %204 = vst.msk [vmem:[#allocation2 + $0x6] sm:$0x1] %vm200, %v190
    %205 = vst.msk [vmem:[#allocation2 + $0x8] sm:$0x1] %vm200, %v173
    %206 = vst.msk [vmem:[#allocation2 + $0xa] sm:$0x1] %vm200, %v187
    %207 = vst.msk [vmem:[#allocation2 + $0xc] sm:$0x1] %vm200, %v189
    %208 = vst.msk [vmem:[#allocation2 + $0xe] sm:$0x1] %vm200, %v191
    %v209 = vlaneseq
    %v210 = vshrl.u32 %v209, 7
    %v211 = vsub.s32 0, %v210
    %v212 = vrot.slane %v166, %v211
    %v213 = vlaneseq
    %v214 = vshrl.u32 %v213, 7
    %v215 = vsub.s32 0, %v214
    %v216 = vrot.slane %v180, %v215
    %v217 = vlaneseq
    %v218 = vshrl.u32 %v217, 7
    %v219 = vsub.s32 0, %v218
    %v220 = vrot.slane %v188, %v219
    %v221 = vlaneseq
    %v222 = vshrl.u32 %v221, 7
    %v223 = vsub.s32 0, %v222
    %v224 = vrot.slane %v190, %v223
    %v225 = vlaneseq
    %v226 = vshrl.u32 %v225, 7
    %v227 = vsub.s32 0, %v226
    %v228 = vrot.slane %v173, %v227
    %v229 = vlaneseq
    %v230 = vshrl.u32 %v229, 7
    %v231 = vsub.s32 0, %v230
    %v232 = vrot.slane %v187, %v231
    %v233 = vlaneseq
    %v234 = vshrl.u32 %v233, 7
    %v235 = vsub.s32 0, %v234
    %v236 = vrot.slane %v189, %v235
    %v237 = vlaneseq
    %v238 = vshrl.u32 %v237, 7
    %v239 = vsub.s32 0, %v238
    %v240 = vrot.slane %v191, %v239
    %241 = vrot.lane.b32.xlu0 %v212, 112
    %v242 = vpop.permute.xlu0 %241
    %243 = vrot.lane.b32.xlu0 %v216, 112
    %v244 = vpop.permute.xlu0 %243
    %245 = vrot.lane.b32.xlu0 %v220, 112
    %v246 = vpop.permute.xlu0 %245
    %247 = vrot.lane.b32.xlu0 %v224, 112
    %v248 = vpop.permute.xlu0 %247
    %249 = vrot.lane.b32.xlu0 %v228, 112
    %v250 = vpop.permute.xlu0 %249
    %251 = vrot.lane.b32.xlu0 %v232, 112
    %v252 = vpop.permute.xlu0 %251
    %253 = vrot.lane.b32.xlu0 %v236, 112
    %v254 = vpop.permute.xlu0 %253
    %255 = vrot.lane.b32.xlu0 %v240, 112
    %v256 = vpop.permute.xlu0 %255
    %265 = vst.msk [vmem:[#allocation2 + $0x1] sm:$0x1] %vm200, %v242
    %266 = vst.msk [vmem:[#allocation2 + $0x3] sm:$0x1] %vm200, %v244
    %267 = vst.msk [vmem:[#allocation2 + $0x5] sm:$0x1] %vm200, %v246
    %268 = vst.msk [vmem:[#allocation2 + $0x7] sm:$0x1] %vm200, %v248
    %269 = vst.msk [vmem:[#allocation2 + $0x9] sm:$0x1] %vm200, %v250
    %270 = vst.msk [vmem:[#allocation2 + $0xb] sm:$0x1] %vm200, %v252
    %271 = vst.msk [vmem:[#allocation2 + $0xd] sm:$0x1] %vm200, %v254
    %272 = vst.msk [vmem:[#allocation2 + $0xf] sm:$0x1] %vm200, %v256
    %v273 = vld [vmem:[#allocation2] sm:$0x3]
    %v274 = vld [vmem:[#allocation2 + $0x2] sm:$0x3]
    %v275 = vld [vmem:[#allocation2 + $0x4] sm:$0x3]
    %v276 = vld [vmem:[#allocation2 + $0x6] sm:$0x3]
    %v277 = vld [vmem:[#allocation2 + $0x8] sm:$0x3]
    %v278 = vld [vmem:[#allocation2 + $0xa] sm:$0x3]
    %v279 = vld [vmem:[#allocation2 + $0xc] sm:$0x3]
    %v280 = vld [vmem:[#allocation2 + $0xe] sm:$0x3]
    %v281 = vld [vmem:[#allocation3] sm:$0xff]
    %v282 = vld [vmem:[#allocation3 + $0x8] sm:$0xff]
    %v283 = vld [vmem:[#allocation3 + $0x10] sm:$0xff]
    %v284 = vld [vmem:[#allocation3 + $0x18] sm:$0xff]
    %v285 = vld [vmem:[#allocation3 + $0x20] sm:$0xff]
    %v286 = vld [vmem:[#allocation3 + $0x28] sm:$0xff]
    %v287 = vld [vmem:[#allocation3 + $0x30] sm:$0xff]
    %v288 = vld [vmem:[#allocation3 + $0x38] sm:$0xff]
    %v289 = vld [vmem:[#allocation3 + $0x40] sm:$0xff]
    %v290 = vld [vmem:[#allocation3 + $0x48] sm:$0xff]
    %v291 = vld [vmem:[#allocation3 + $0x50] sm:$0xff]
    %v292 = vld [vmem:[#allocation3 + $0x58] sm:$0xff]
    %v293 = vld [vmem:[#allocation3 + $0x60] sm:$0xff]
    %v294 = vld [vmem:[#allocation3 + $0x68] sm:$0xff]
    %v295 = vld [vmem:[#allocation3 + $0x70] sm:$0xff]
    %v296 = vld [vmem:[#allocation3 + $0x78] sm:$0xff]
    %vm297 = vcmask 130048
    %v299 = vsel %vm297, %v273, 0
    %301 = vmatprep.subr.mxu0 0.0
    %302 = vmatpush1.msra.mxu0 %v281
    %303 = vmatprep.subr.mxu0 0.0
    %304 = vmatpush1.msra.mxu0 %v282
    %305 = vmatprep.subr.mxu0 0.0
    %306 = vmatpush1.msra.mxu0 0.0
    %307 = vmatprep.subr.mxu0 0.0
    %308 = vmatpush1.msra.mxu0 0.0
    %309 = vmatprep.subr.mxu0 0.0
    %310 = vmatpush1.msra.mxu0 0.0
    %311 = vmatprep.subr.mxu0 0.0
    %312 = vmatpush1.msra.mxu0 0.0
    %313 = vmatprep.subr.mxu0 0.0
    %314 = vmatpush1.msra.mxu0 0.0
    %315 = vmatprep.subr.mxu0 0.0
    %316 = vmatpush1.msra.mxu0 0.0
    %317 = vmatprep.subr.mxu0 0.0
    %318 = vmatpush1.msra.mxu0 0.0
    %319 = vmatprep.subr.mxu0 0.0
    %320 = vmatpush1.msra.mxu0 0.0
    %321 = vmatprep.subr.mxu0 0.0
    %322 = vmatpush1.msra.mxu0 0.0
    %323 = vmatprep.subr.mxu0 0.0
    %324 = vmatpush1.msra.mxu0 0.0
    %325 = vmatprep.subr.mxu0 0.0
    %326 = vmatpush1.msra.mxu0 0.0
    %327 = vmatprep.subr.mxu0 0.0
    %328 = vmatpush1.msra.mxu0 0.0
    %329 = vmatprep.subr.mxu0 0.0
    %330 = vmatpush1.msra.mxu0 0.0
    %331 = vmatprep.subr.mxu0 0.0
    %332 = vmatpush1.msra.mxu0 0.0
    %333 = vmatprep.subr.mxu0 0.0
    %334 = vmatpush1.msra.mxu0 0.0
    %335 = vmatprep.subr.mxu0 0.0
    %336 = vmatpush1.msra.mxu0 0.0
    %337 = vmatprep.subr.mxu0 0.0
    %338 = vmatpush1.msra.mxu0 0.0
    %339 = vmatprep.subr.mxu0 0.0
    %340 = vmatpush1.msra.mxu0 0.0
    %341 = vmatprep.subr.mxu0 0.0
    %342 = vmatpush1.msra.mxu0 0.0
    %343 = vmatprep.subr.mxu0 0.0
    %344 = vmatpush1.msra.mxu0 0.0
    %345 = vmatprep.subr.mxu0 0.0
    %346 = vmatpush1.msra.mxu0 0.0
    %347 = vmatprep.subr.mxu0 0.0
    %348 = vmatpush1.msra.mxu0 0.0
    %349 = vmatprep.subr.mxu0 0.0
    %350 = vmatpush1.msra.mxu0 0.0
    %351 = vmatprep.subr.mxu0 0.0
    %352 = vmatpush1.msra.mxu0 0.0
    %353 = vmatprep.subr.mxu0 0.0
    %354 = vmatpush1.msra.mxu0 0.0
    %355 = vmatprep.subr.mxu0 0.0
    %356 = vmatpush1.msra.mxu0 0.0
    %357 = vmatprep.subr.mxu0 0.0
    %358 = vmatpush1.msra.mxu0 0.0
    %359 = vmatprep.subr.mxu0 0.0
    %360 = vmatpush1.msra.mxu0 0.0
    %361 = vmatprep.subr.mxu0 0.0
    %362 = vmatpush1.msra.mxu0 0.0
    %363 = vmatprep.subr.mxu0 0.0
    %364 = vmatpush1.msra.mxu0 0.0
    %365 = vmatprep.mubr.f32.mxu0 0.0
    %366 = vmatmul.mubr.f32.gmra.mrb[0].mxu0 %v299
    %v367 = vpop.f32.mrb[0].mxu0
    %v368 = vadd.f32 0.0, %v367
    %v369 = vpop.f32.mrb[0].mxu0
    %370 = vdwg.mxu0
    %v372 = vsel %vm297, %v274, 0
    %374 = vmatprep.subr.mxu0 0.0
    %375 = vmatpush1.msra.mxu0 %v283
    %376 = vmatprep.subr.mxu0 0.0
    %377 = vmatpush1.msra.mxu0 %v284
    %378 = vmatprep.subr.mxu0 0.0
    %379 = vmatpush1.msra.mxu0 0.0
    %380 = vmatprep.subr.mxu0 0.0
    %381 = vmatpush1.msra.mxu0 0.0
    %382 = vmatprep.subr.mxu0 0.0
    %383 = vmatpush1.msra.mxu0 0.0
    %384 = vmatprep.subr.mxu0 0.0
    %385 = vmatpush1.msra.mxu0 0.0
    %386 = vmatprep.subr.mxu0 0.0
    %387 = vmatpush1.msra.mxu0 0.0
    %388 = vmatprep.subr.mxu0 0.0
    %389 = vmatpush1.msra.mxu0 0.0
    %390 = vmatprep.subr.mxu0 0.0
    %391 = vmatpush1.msra.mxu0 0.0
    %392 = vmatprep.subr.mxu0 0.0
    %393 = vmatpush1.msra.mxu0 0.0
    %394 = vmatprep.subr.mxu0 0.0
    %395 = vmatpush1.msra.mxu0 0.0
    %396 = vmatprep.subr.mxu0 0.0
    %397 = vmatpush1.msra.mxu0 0.0
    %398 = vmatprep.subr.mxu0 0.0
    %399 = vmatpush1.msra.mxu0 0.0
    %400 = vmatprep.subr.mxu0 0.0
    %401 = vmatpush1.msra.mxu0 0.0
    %402 = vmatprep.subr.mxu0 0.0
    %403 = vmatpush1.msra.mxu0 0.0
    %404 = vmatprep.subr.mxu0 0.0
    %405 = vmatpush1.msra.mxu0 0.0
    %406 = vmatprep.subr.mxu0 0.0
    %407 = vmatpush1.msra.mxu0 0.0
    %408 = vmatprep.subr.mxu0 0.0
    %409 = vmatpush1.msra.mxu0 0.0
    %410 = vmatprep.subr.mxu0 0.0
    %411 = vmatpush1.msra.mxu0 0.0
    %412 = vmatprep.subr.mxu0 0.0
    %413 = vmatpush1.msra.mxu0 0.0
    %414 = vmatprep.subr.mxu0 0.0
    %415 = vmatpush1.msra.mxu0 0.0
    %416 = vmatprep.subr.mxu0 0.0
    %417 = vmatpush1.msra.mxu0 0.0
    %418 = vmatprep.subr.mxu0 0.0
    %419 = vmatpush1.msra.mxu0 0.0
    %420 = vmatprep.subr.mxu0 0.0
    %421 = vmatpush1.msra.mxu0 0.0
    %422 = vmatprep.subr.mxu0 0.0
    %423 = vmatpush1.msra.mxu0 0.0
    %424 = vmatprep.subr.mxu0 0.0
    %425 = vmatpush1.msra.mxu0 0.0
    %426 = vmatprep.subr.mxu0 0.0
    %427 = vmatpush1.msra.mxu0 0.0
    %428 = vmatprep.subr.mxu0 0.0
    %429 = vmatpush1.msra.mxu0 0.0
    %430 = vmatprep.subr.mxu0 0.0
    %431 = vmatpush1.msra.mxu0 0.0
    %432 = vmatprep.subr.mxu0 0.0
    %433 = vmatpush1.msra.mxu0 0.0
    %434 = vmatprep.subr.mxu0 0.0
    %435 = vmatpush1.msra.mxu0 0.0
    %436 = vmatprep.subr.mxu0 0.0
    %437 = vmatpush1.msra.mxu0 0.0
    %438 = vmatprep.mubr.f32.mxu0 0.0
    %439 = vmatmul.mubr.f32.gmra.mrb[0].mxu0 %v372
    %v440 = vpop.f32.mrb[0].mxu0
    %v441 = vadd.f32 0.0, %v440
    %v442 = vpop.f32.mrb[0].mxu0
    %443 = vdwg.mxu0
    %v445 = vsel %vm297, %v275, 0
    %447 = vmatprep.subr.mxu0 0.0
    %448 = vmatpush1.msra.mxu0 %v285
    %449 = vmatprep.subr.mxu0 0.0
    %450 = vmatpush1.msra.mxu0 %v286
    %451 = vmatprep.subr.mxu0 0.0
    %452 = vmatpush1.msra.mxu0 0.0
    %453 = vmatprep.subr.mxu0 0.0
    %454 = vmatpush1.msra.mxu0 0.0
    %455 = vmatprep.subr.mxu0 0.0
    %456 = vmatpush1.msra.mxu0 0.0
    %457 = vmatprep.subr.mxu0 0.0
    %458 = vmatpush1.msra.mxu0 0.0
    %459 = vmatprep.subr.mxu0 0.0
    %460 = vmatpush1.msra.mxu0 0.0
    %461 = vmatprep.subr.mxu0 0.0
    %462 = vmatpush1.msra.mxu0 0.0
    %463 = vmatprep.subr.mxu0 0.0
    %464 = vmatpush1.msra.mxu0 0.0
    %465 = vmatprep.subr.mxu0 0.0
    %466 = vmatpush1.msra.mxu0 0.0
    %467 = vmatprep.subr.mxu0 0.0
    %468 = vmatpush1.msra.mxu0 0.0
    %469 = vmatprep.subr.mxu0 0.0
    %470 = vmatpush1.msra.mxu0 0.0
    %471 = vmatprep.subr.mxu0 0.0
    %472 = vmatpush1.msra.mxu0 0.0
    %473 = vmatprep.subr.mxu0 0.0
    %474 = vmatpush1.msra.mxu0 0.0
    %475 = vmatprep.subr.mxu0 0.0
    %476 = vmatpush1.msra.mxu0 0.0
    %477 = vmatprep.subr.mxu0 0.0
    %478 = vmatpush1.msra.mxu0 0.0
    %479 = vmatprep.subr.mxu0 0.0
    %480 = vmatpush1.msra.mxu0 0.0
    %481 = vmatprep.subr.mxu0 0.0
    %482 = vmatpush1.msra.mxu0 0.0
    %483 = vmatprep.subr.mxu0 0.0
    %484 = vmatpush1.msra.mxu0 0.0
    %485 = vmatprep.subr.mxu0 0.0
    %486 = vmatpush1.msra.mxu0 0.0
    %487 = vmatprep.subr.mxu0 0.0
    %488 = vmatpush1.msra.mxu0 0.0
    %489 = vmatprep.subr.mxu0 0.0
    %490 = vmatpush1.msra.mxu0 0.0
    %491 = vmatprep.subr.mxu0 0.0
    %492 = vmatpush1.msra.mxu0 0.0
    %493 = vmatprep.subr.mxu0 0.0
    %494 = vmatpush1.msra.mxu0 0.0
    %495 = vmatprep.subr.mxu0 0.0
    %496 = vmatpush1.msra.mxu0 0.0
    %497 = vmatprep.subr.mxu0 0.0
    %498 = vmatpush1.msra.mxu0 0.0
    %499 = vmatprep.subr.mxu0 0.0
    %500 = vmatpush1.msra.mxu0 0.0
    %501 = vmatprep.subr.mxu0 0.0
    %502 = vmatpush1.msra.mxu0 0.0
    %503 = vmatprep.subr.mxu0 0.0
    %504 = vmatpush1.msra.mxu0 0.0
    %505 = vmatprep.subr.mxu0 0.0
    %506 = vmatpush1.msra.mxu0 0.0
    %507 = vmatprep.subr.mxu0 0.0
    %508 = vmatpush1.msra.mxu0 0.0
    %509 = vmatprep.subr.mxu0 0.0
    %510 = vmatpush1.msra.mxu0 0.0
    %511 = vmatprep.mubr.f32.mxu0 0.0
    %512 = vmatmul.mubr.f32.gmra.mrb[0].mxu0 %v445
    %v513 = vpop.f32.mrb[0].mxu0
    %v514 = vadd.f32 0.0, %v513
    %v515 = vpop.f32.mrb[0].mxu0
    %516 = vdwg.mxu0
    %v518 = vsel %vm297, %v276, 0
    %520 = vmatprep.subr.mxu0 0.0
    %521 = vmatpush1.msra.mxu0 %v287
    %522 = vmatprep.subr.mxu0 0.0
    %523 = vmatpush1.msra.mxu0 %v288
    %524 = vmatprep.subr.mxu0 0.0
    %525 = vmatpush1.msra.mxu0 0.0
    %526 = vmatprep.subr.mxu0 0.0
    %527 = vmatpush1.msra.mxu0 0.0
    %528 = vmatprep.subr.mxu0 0.0
    %529 = vmatpush1.msra.mxu0 0.0
    %530 = vmatprep.subr.mxu0 0.0
    %531 = vmatpush1.msra.mxu0 0.0
    %532 = vmatprep.subr.mxu0 0.0
    %533 = vmatpush1.msra.mxu0 0.0
    %534 = vmatprep.subr.mxu0 0.0
    %535 = vmatpush1.msra.mxu0 0.0
    %536 = vmatprep.subr.mxu0 0.0
    %537 = vmatpush1.msra.mxu0 0.0
    %538 = vmatprep.subr.mxu0 0.0
    %539 = vmatpush1.msra.mxu0 0.0
    %540 = vmatprep.subr.mxu0 0.0
    %541 = vmatpush1.msra.mxu0 0.0
    %542 = vmatprep.subr.mxu0 0.0
    %543 = vmatpush1.msra.mxu0 0.0
    %544 = vmatprep.subr.mxu0 0.0
    %545 = vmatpush1.msra.mxu0 0.0
    %546 = vmatprep.subr.mxu0 0.0
    %547 = vmatpush1.msra.mxu0 0.0
    %548 = vmatprep.subr.mxu0 0.0
    %549 = vmatpush1.msra.mxu0 0.0
    %550 = vmatprep.subr.mxu0 0.0
    %551 = vmatpush1.msra.mxu0 0.0
    %552 = vmatprep.subr.mxu0 0.0
    %553 = vmatpush1.msra.mxu0 0.0
    %554 = vmatprep.subr.mxu0 0.0
    %555 = vmatpush1.msra.mxu0 0.0
    %556 = vmatprep.subr.mxu0 0.0
    %557 = vmatpush1.msra.mxu0 0.0
    %558 = vmatprep.subr.mxu0 0.0
    %559 = vmatpush1.msra.mxu0 0.0
    %560 = vmatprep.subr.mxu0 0.0
    %561 = vmatpush1.msra.mxu0 0.0
    %562 = vmatprep.subr.mxu0 0.0
    %563 = vmatpush1.msra.mxu0 0.0
    %564 = vmatprep.subr.mxu0 0.0
    %565 = vmatpush1.msra.mxu0 0.0
    %566 = vmatprep.subr.mxu0 0.0
    %567 = vmatpush1.msra.mxu0 0.0
    %568 = vmatprep.subr.mxu0 0.0
    %569 = vmatpush1.msra.mxu0 0.0
    %570 = vmatprep.subr.mxu0 0.0
    %571 = vmatpush1.msra.mxu0 0.0
    %572 = vmatprep.subr.mxu0 0.0
    %573 = vmatpush1.msra.mxu0 0.0
    %574 = vmatprep.subr.mxu0 0.0
    %575 = vmatpush1.msra.mxu0 0.0
    %576 = vmatprep.subr.mxu0 0.0
    %577 = vmatpush1.msra.mxu0 0.0
    %578 = vmatprep.subr.mxu0 0.0
    %579 = vmatpush1.msra.mxu0 0.0
    %580 = vmatprep.subr.mxu0 0.0
    %581 = vmatpush1.msra.mxu0 0.0
    %582 = vmatprep.subr.mxu0 0.0
    %583 = vmatpush1.msra.mxu0 0.0
    %584 = vmatprep.mubr.f32.mxu0 0.0
    %585 = vmatmul.mubr.f32.gmra.mrb[0].mxu0 %v518
    %v586 = vpop.f32.mrb[0].mxu0
    %v587 = vadd.f32 0.0, %v586
    %v588 = vpop.f32.mrb[0].mxu0
    %589 = vdwg.mxu0
    %v591 = vsel %vm297, %v277, 0
    %593 = vmatprep.subr.mxu0 0.0
    %594 = vmatpush1.msra.mxu0 %v289
    %595 = vmatprep.subr.mxu0 0.0
    %596 = vmatpush1.msra.mxu0 %v290
    %597 = vmatprep.subr.mxu0 0.0
    %598 = vmatpush1.msra.mxu0 0.0
    %599 = vmatprep.subr.mxu0 0.0
    %600 = vmatpush1.msra.mxu0 0.0
    %601 = vmatprep.subr.mxu0 0.0
    %602 = vmatpush1.msra.mxu0 0.0
    %603 = vmatprep.subr.mxu0 0.0
    %604 = vmatpush1.msra.mxu0 0.0
    %605 = vmatprep.subr.mxu0 0.0
    %606 = vmatpush1.msra.mxu0 0.0
    %607 = vmatprep.subr.mxu0 0.0
    %608 = vmatpush1.msra.mxu0 0.0
    %609 = vmatprep.subr.mxu0 0.0
    %610 = vmatpush1.msra.mxu0 0.0
    %611 = vmatprep.subr.mxu0 0.0
    %612 = vmatpush1.msra.mxu0 0.0
    %613 = vmatprep.subr.mxu0 0.0
    %614 = vmatpush1.msra.mxu0 0.0
    %615 = vmatprep.subr.mxu0 0.0
    %616 = vmatpush1.msra.mxu0 0.0
    %617 = vmatprep.subr.mxu0 0.0
    %618 = vmatpush1.msra.mxu0 0.0
    %619 = vmatprep.subr.mxu0 0.0
    %620 = vmatpush1.msra.mxu0 0.0
    %621 = vmatprep.subr.mxu0 0.0
    %622 = vmatpush1.msra.mxu0 0.0
    %623 = vmatprep.subr.mxu0 0.0
    %624 = vmatpush1.msra.mxu0 0.0
    %625 = vmatprep.subr.mxu0 0.0
    %626 = vmatpush1.msra.mxu0 0.0
    %627 = vmatprep.subr.mxu0 0.0
    %628 = vmatpush1.msra.mxu0 0.0
    %629 = vmatprep.subr.mxu0 0.0
    %630 = vmatpush1.msra.mxu0 0.0
    %631 = vmatprep.subr.mxu0 0.0
    %632 = vmatpush1.msra.mxu0 0.0
    %633 = vmatprep.subr.mxu0 0.0
    %634 = vmatpush1.msra.mxu0 0.0
    %635 = vmatprep.subr.mxu0 0.0
    %636 = vmatpush1.msra.mxu0 0.0
    %637 = vmatprep.subr.mxu0 0.0
    %638 = vmatpush1.msra.mxu0 0.0
    %639 = vmatprep.subr.mxu0 0.0
    %640 = vmatpush1.msra.mxu0 0.0
    %641 = vmatprep.subr.mxu0 0.0
    %642 = vmatpush1.msra.mxu0 0.0
    %643 = vmatprep.subr.mxu0 0.0
    %644 = vmatpush1.msra.mxu0 0.0
    %645 = vmatprep.subr.mxu0 0.0
    %646 = vmatpush1.msra.mxu0 0.0
    %647 = vmatprep.subr.mxu0 0.0
    %648 = vmatpush1.msra.mxu0 0.0
    %649 = vmatprep.subr.mxu0 0.0
    %650 = vmatpush1.msra.mxu0 0.0
    %651 = vmatprep.subr.mxu0 0.0
    %652 = vmatpush1.msra.mxu0 0.0
    %653 = vmatprep.subr.mxu0 0.0
    %654 = vmatpush1.msra.mxu0 0.0
    %655 = vmatprep.subr.mxu0 0.0
    %656 = vmatpush1.msra.mxu0 0.0
    %657 = vmatprep.mubr.f32.mxu0 0.0
    %658 = vmatmul.mubr.f32.gmra.mrb[0].mxu0 %v591
    %v659 = vpop.f32.mrb[0].mxu0
    %v660 = vadd.f32 0.0, %v659
    %v661 = vpop.f32.mrb[0].mxu0
    %662 = vdwg.mxu0
    %v664 = vsel %vm297, %v278, 0
    %666 = vmatprep.subr.mxu0 0.0
    %667 = vmatpush1.msra.mxu0 %v291
    %668 = vmatprep.subr.mxu0 0.0
    %669 = vmatpush1.msra.mxu0 %v292
    %670 = vmatprep.subr.mxu0 0.0
    %671 = vmatpush1.msra.mxu0 0.0
    %672 = vmatprep.subr.mxu0 0.0
    %673 = vmatpush1.msra.mxu0 0.0
    %674 = vmatprep.subr.mxu0 0.0
    %675 = vmatpush1.msra.mxu0 0.0
    %676 = vmatprep.subr.mxu0 0.0
    %677 = vmatpush1.msra.mxu0 0.0
    %678 = vmatprep.subr.mxu0 0.0
    %679 = vmatpush1.msra.mxu0 0.0
    %680 = vmatprep.subr.mxu0 0.0
    %681 = vmatpush1.msra.mxu0 0.0
    %682 = vmatprep.subr.mxu0 0.0
    %683 = vmatpush1.msra.mxu0 0.0
    %684 = vmatprep.subr.mxu0 0.0
    %685 = vmatpush1.msra.mxu0 0.0
    %686 = vmatprep.subr.mxu0 0.0
    %687 = vmatpush1.msra.mxu0 0.0
    %688 = vmatprep.subr.mxu0 0.0
    %689 = vmatpush1.msra.mxu0 0.0
    %690 = vmatprep.subr.mxu0 0.0
    %691 = vmatpush1.msra.mxu0 0.0
    %692 = vmatprep.subr.mxu0 0.0
    %693 = vmatpush1.msra.mxu0 0.0
    %694 = vmatprep.subr.mxu0 0.0
    %695 = vmatpush1.msra.mxu0 0.0
    %696 = vmatprep.subr.mxu0 0.0
    %697 = vmatpush1.msra.mxu0 0.0
    %698 = vmatprep.subr.mxu0 0.0
    %699 = vmatpush1.msra.mxu0 0.0
    %700 = vmatprep.subr.mxu0 0.0
    %701 = vmatpush1.msra.mxu0 0.0
    %702 = vmatprep.subr.mxu0 0.0
    %703 = vmatpush1.msra.mxu0 0.0
    %704 = vmatprep.subr.mxu0 0.0
    %705 = vmatpush1.msra.mxu0 0.0
    %706 = vmatprep.subr.mxu0 0.0
    %707 = vmatpush1.msra.mxu0 0.0
    %708 = vmatprep.subr.mxu0 0.0
    %709 = vmatpush1.msra.mxu0 0.0
    %710 = vmatprep.subr.mxu0 0.0
    %711 = vmatpush1.msra.mxu0 0.0
    %712 = vmatprep.subr.mxu0 0.0
    %713 = vmatpush1.msra.mxu0 0.0
    %714 = vmatprep.subr.mxu0 0.0
    %715 = vmatpush1.msra.mxu0 0.0
    %716 = vmatprep.subr.mxu0 0.0
    %717 = vmatpush1.msra.mxu0 0.0
    %718 = vmatprep.subr.mxu0 0.0
    %719 = vmatpush1.msra.mxu0 0.0
    %720 = vmatprep.subr.mxu0 0.0
    %721 = vmatpush1.msra.mxu0 0.0
    %722 = vmatprep.subr.mxu0 0.0
    %723 = vmatpush1.msra.mxu0 0.0
    %724 = vmatprep.subr.mxu0 0.0
    %725 = vmatpush1.msra.mxu0 0.0
    %726 = vmatprep.subr.mxu0 0.0
    %727 = vmatpush1.msra.mxu0 0.0
    %728 = vmatprep.subr.mxu0 0.0
    %729 = vmatpush1.msra.mxu0 0.0
    %730 = vmatprep.mubr.f32.mxu0 0.0
    %731 = vmatmul.mubr.f32.gmra.mrb[0].mxu0 %v664
    %v732 = vpop.f32.mrb[0].mxu0
    %v733 = vadd.f32 0.0, %v732
    %v734 = vpop.f32.mrb[0].mxu0
    %735 = vdwg.mxu0
    %v737 = vsel %vm297, %v279, 0
    %739 = vmatprep.subr.mxu0 0.0
    %740 = vmatpush1.msra.mxu0 %v293
    %741 = vmatprep.subr.mxu0 0.0
    %742 = vmatpush1.msra.mxu0 %v294
    %743 = vmatprep.subr.mxu0 0.0
    %744 = vmatpush1.msra.mxu0 0.0
    %745 = vmatprep.subr.mxu0 0.0
    %746 = vmatpush1.msra.mxu0 0.0
    %747 = vmatprep.subr.mxu0 0.0
    %748 = vmatpush1.msra.mxu0 0.0
    %749 = vmatprep.subr.mxu0 0.0
    %750 = vmatpush1.msra.mxu0 0.0
    %751 = vmatprep.subr.mxu0 0.0
    %752 = vmatpush1.msra.mxu0 0.0
    %753 = vmatprep.subr.mxu0 0.0
    %754 = vmatpush1.msra.mxu0 0.0
    %755 = vmatprep.subr.mxu0 0.0
    %756 = vmatpush1.msra.mxu0 0.0
    %757 = vmatprep.subr.mxu0 0.0
    %758 = vmatpush1.msra.mxu0 0.0
    %759 = vmatprep.subr.mxu0 0.0
    %760 = vmatpush1.msra.mxu0 0.0
    %761 = vmatprep.subr.mxu0 0.0
    %762 = vmatpush1.msra.mxu0 0.0
    %763 = vmatprep.subr.mxu0 0.0
    %764 = vmatpush1.msra.mxu0 0.0
    %765 = vmatprep.subr.mxu0 0.0
    %766 = vmatpush1.msra.mxu0 0.0
    %767 = vmatprep.subr.mxu0 0.0
    %768 = vmatpush1.msra.mxu0 0.0
    %769 = vmatprep.subr.mxu0 0.0
    %770 = vmatpush1.msra.mxu0 0.0
    %771 = vmatprep.subr.mxu0 0.0
    %772 = vmatpush1.msra.mxu0 0.0
    %773 = vmatprep.subr.mxu0 0.0
    %774 = vmatpush1.msra.mxu0 0.0
    %775 = vmatprep.subr.mxu0 0.0
    %776 = vmatpush1.msra.mxu0 0.0
    %777 = vmatprep.subr.mxu0 0.0
    %778 = vmatpush1.msra.mxu0 0.0
    %779 = vmatprep.subr.mxu0 0.0
    %780 = vmatpush1.msra.mxu0 0.0
    %781 = vmatprep.subr.mxu0 0.0
    %782 = vmatpush1.msra.mxu0 0.0
    %783 = vmatprep.subr.mxu0 0.0
    %784 = vmatpush1.msra.mxu0 0.0
    %785 = vmatprep.subr.mxu0 0.0
    %786 = vmatpush1.msra.mxu0 0.0
    %787 = vmatprep.subr.mxu0 0.0
    %788 = vmatpush1.msra.mxu0 0.0
    %789 = vmatprep.subr.mxu0 0.0
    %790 = vmatpush1.msra.mxu0 0.0
    %791 = vmatprep.subr.mxu0 0.0
    %792 = vmatpush1.msra.mxu0 0.0
    %793 = vmatprep.subr.mxu0 0.0
    %794 = vmatpush1.msra.mxu0 0.0
    %795 = vmatprep.subr.mxu0 0.0
    %796 = vmatpush1.msra.mxu0 0.0
    %797 = vmatprep.subr.mxu0 0.0
    %798 = vmatpush1.msra.mxu0 0.0
    %799 = vmatprep.subr.mxu0 0.0
    %800 = vmatpush1.msra.mxu0 0.0
    %801 = vmatprep.subr.mxu0 0.0
    %802 = vmatpush1.msra.mxu0 0.0
    %803 = vmatprep.mubr.f32.mxu0 0.0
    %804 = vmatmul.mubr.f32.gmra.mrb[0].mxu0 %v737
    %v805 = vpop.f32.mrb[0].mxu0
    %v806 = vadd.f32 0.0, %v805
    %v807 = vpop.f32.mrb[0].mxu0
    %808 = vdwg.mxu0
    %v810 = vsel %vm297, %v280, 0
    %812 = vmatprep.subr.mxu0 0.0
    %813 = vmatpush1.msra.mxu0 %v295
    %814 = vmatprep.subr.mxu0 0.0
    %815 = vmatpush1.msra.mxu0 %v296
    %816 = vmatprep.subr.mxu0 0.0
    %817 = vmatpush1.msra.mxu0 0.0
    %818 = vmatprep.subr.mxu0 0.0
    %819 = vmatpush1.msra.mxu0 0.0
    %820 = vmatprep.subr.mxu0 0.0
    %821 = vmatpush1.msra.mxu0 0.0
    %822 = vmatprep.subr.mxu0 0.0
    %823 = vmatpush1.msra.mxu0 0.0
    %824 = vmatprep.subr.mxu0 0.0
    %825 = vmatpush1.msra.mxu0 0.0
    %826 = vmatprep.subr.mxu0 0.0
    %827 = vmatpush1.msra.mxu0 0.0
    %828 = vmatprep.subr.mxu0 0.0
    %829 = vmatpush1.msra.mxu0 0.0
    %830 = vmatprep.subr.mxu0 0.0
    %831 = vmatpush1.msra.mxu0 0.0
    %832 = vmatprep.subr.mxu0 0.0
    %833 = vmatpush1.msra.mxu0 0.0
    %834 = vmatprep.subr.mxu0 0.0
    %835 = vmatpush1.msra.mxu0 0.0
    %836 = vmatprep.subr.mxu0 0.0
    %837 = vmatpush1.msra.mxu0 0.0
    %838 = vmatprep.subr.mxu0 0.0
    %839 = vmatpush1.msra.mxu0 0.0
    %840 = vmatprep.subr.mxu0 0.0
    %841 = vmatpush1.msra.mxu0 0.0
    %842 = vmatprep.subr.mxu0 0.0
    %843 = vmatpush1.msra.mxu0 0.0
    %844 = vmatprep.subr.mxu0 0.0
    %845 = vmatpush1.msra.mxu0 0.0
    %846 = vmatprep.subr.mxu0 0.0
    %847 = vmatpush1.msra.mxu0 0.0
    %848 = vmatprep.subr.mxu0 0.0
    %849 = vmatpush1.msra.mxu0 0.0
    %850 = vmatprep.subr.mxu0 0.0
    %851 = vmatpush1.msra.mxu0 0.0
    %852 = vmatprep.subr.mxu0 0.0
    %853 = vmatpush1.msra.mxu0 0.0
    %854 = vmatprep.subr.mxu0 0.0
    %855 = vmatpush1.msra.mxu0 0.0
    %856 = vmatprep.subr.mxu0 0.0
    %857 = vmatpush1.msra.mxu0 0.0
    %858 = vmatprep.subr.mxu0 0.0
    %859 = vmatpush1.msra.mxu0 0.0
    %860 = vmatprep.subr.mxu0 0.0
    %861 = vmatpush1.msra.mxu0 0.0
    %862 = vmatprep.subr.mxu0 0.0
    %863 = vmatpush1.msra.mxu0 0.0
    %864 = vmatprep.subr.mxu0 0.0
    %865 = vmatpush1.msra.mxu0 0.0
    %866 = vmatprep.subr.mxu0 0.0
    %867 = vmatpush1.msra.mxu0 0.0
    %868 = vmatprep.subr.mxu0 0.0
    %869 = vmatpush1.msra.mxu0 0.0
    %870 = vmatprep.subr.mxu0 0.0
    %871 = vmatpush1.msra.mxu0 0.0
    %872 = vmatprep.subr.mxu0 0.0
    %873 = vmatpush1.msra.mxu0 0.0
    %874 = vmatprep.subr.mxu0 0.0
    %875 = vmatpush1.msra.mxu0 0.0
    %876 = vmatprep.mubr.f32.mxu0 0.0
    %877 = vmatmul.mubr.f32.gmra.mrb[0].mxu0 %v810
    %v878 = vpop.f32.mrb[0].mxu0
    %v879 = vadd.f32 0.0, %v878
    %v880 = vpop.f32.mrb[0].mxu0
    %881 = vdwg.mxu0
    %v882 = vmin.f32 %v368, 0.0
    %v883 = vmin.f32 %v441, 0.0
    %v884 = vmin.f32 %v514, 0.0
    %v885 = vmin.f32 %v587, 0.0
    %v886 = vmin.f32 %v660, 0.0
    %v887 = vmin.f32 %v733, 0.0
    %v888 = vmin.f32 %v806, 0.0
    %v889 = vmin.f32 %v879, 0.0
    %vm890 = vcmp.gt.f32.partialorder %v882, -0.0625
    %vm891 = vcmp.gt.f32.partialorder %v883, -0.0625
    %vm892 = vcmp.gt.f32.partialorder %v884, -0.0625
    %vm893 = vcmp.gt.f32.partialorder %v885, -0.0625
    %vm894 = vcmp.gt.f32.partialorder %v886, -0.0625
    %vm895 = vcmp.gt.f32.partialorder %v887, -0.0625
    %vm896 = vcmp.gt.f32.partialorder %v888, -0.0625
    %vm897 = vcmp.gt.f32.partialorder %v889, -0.0625
    %v898 = vmul.f32 %v882, 0.16666667
    %v899 = vmul.f32 %v883, 0.16666667
    %v900 = vmul.f32 %v884, 0.16666667
    %v901 = vmul.f32 %v885, 0.16666667
    %v902 = vmul.f32 %v886, 0.16666667
    %v903 = vmul.f32 %v887, 0.16666667
    %v904 = vmul.f32 %v888, 0.16666667
    %v905 = vmul.f32 %v889, 0.16666667
    %v906 = vadd.f32 %v898, 0.5
    %v907 = vadd.f32 %v899, 0.5
    %v908 = vadd.f32 %v900, 0.5
    %v909 = vadd.f32 %v901, 0.5
    %v910 = vadd.f32 %v902, 0.5
    %v911 = vadd.f32 %v903, 0.5
    %v912 = vadd.f32 %v904, 0.5
    %v913 = vadd.f32 %v905, 0.5
    %v914 = vmul.f32 %v882, %v906
    %v915 = vmul.f32 %v883, %v907
    %v916 = vmul.f32 %v884, %v908
    %v917 = vmul.f32 %v885, %v909
    %v918 = vmul.f32 %v886, %v910
    %v919 = vmul.f32 %v887, %v911
    %v920 = vmul.f32 %v888, %v912
    %v921 = vmul.f32 %v889, %v913
    %v922 = vadd.f32 %v914, 1.0
    %v923 = vadd.f32 %v915, 1.0
    %v924 = vadd.f32 %v916, 1.0
    %v925 = vadd.f32 %v917, 1.0
    %v926 = vadd.f32 %v918, 1.0
    %v927 = vadd.f32 %v919, 1.0
    %v928 = vadd.f32 %v920, 1.0
    %v929 = vadd.f32 %v921, 1.0
    %v930 = vmul.f32 %v882, %v922
    %v931 = vmul.f32 %v883, %v923
    %v932 = vmul.f32 %v884, %v924
    %v933 = vmul.f32 %v885, %v925
    %v934 = vmul.f32 %v886, %v926
    %v935 = vmul.f32 %v887, %v927
    %v936 = vmul.f32 %v888, %v928
    %v937 = vmul.f32 %v889, %v929
    %v938 = vmul.f32 %v882, 1.442695
    %v939 = vpow.pop %v938
    %v940 = vmul.f32 %v883, 1.442695
    %v941 = vpow.pop %v940
    %v942 = vmul.f32 %v884, 1.442695
    %v943 = vpow.pop %v942
    %v944 = vmul.f32 %v885, 1.442695
    %v945 = vpow.pop %v944
    %v946 = vmul.f32 %v886, 1.442695
    %v947 = vpow.pop %v946
    %v948 = vmul.f32 %v887, 1.442695
    %v949 = vpow.pop %v948
    %v950 = vmul.f32 %v888, 1.442695
    %v951 = vpow.pop %v950
    %v952 = vmul.f32 %v889, 1.442695
    %v953 = vpow.pop %v952
    %v954 = vsub.f32 %v939, 1.0
    %v955 = vsub.f32 %v941, 1.0
    %v956 = vsub.f32 %v943, 1.0
    %v957 = vsub.f32 %v945, 1.0
    %v958 = vsub.f32 %v947, 1.0
    %v959 = vsub.f32 %v949, 1.0
    %v960 = vsub.f32 %v951, 1.0
    %v961 = vsub.f32 %v953, 1.0
    %v962 = vsel %vm890, %v930, %v954
    %v963 = vsel %vm891, %v931, %v955
    %v964 = vsel %vm892, %v932, %v956
    %v965 = vsel %vm893, %v933, %v957
    %v966 = vsel %vm894, %v934, %v958
    %v967 = vsel %vm895, %v935, %v959
    %v968 = vsel %vm896, %v936, %v960
    %v969 = vsel %vm897, %v937, %v961
    %vm970 = vcmp.gt.f32.partialorder %v368, 0.0
    %vm971 = vcmp.gt.f32.partialorder %v441, 0.0
    %vm972 = vcmp.gt.f32.partialorder %v514, 0.0
    %vm973 = vcmp.gt.f32.partialorder %v587, 0.0
    %vm974 = vcmp.gt.f32.partialorder %v660, 0.0
    %vm975 = vcmp.gt.f32.partialorder %v733, 0.0
    %vm976 = vcmp.gt.f32.partialorder %v806, 0.0
    %vm977 = vcmp.gt.f32.partialorder %v879, 0.0
    %v978 = vsel %vm970, %v368, %v962
    %v979 = vsel %vm971, %v441, %v963
    %v980 = vsel %vm972, %v514, %v964
    %v981 = vsel %vm973, %v587, %v965
    %v982 = vsel %vm974, %v660, %v966
    %v983 = vsel %vm975, %v733, %v967
    %v984 = vsel %vm976, %v806, %v968
    %v985 = vsel %vm977, %v879, %v969
    %vm986 = vcmask 123904
    %987 = vst.msk [vmem:[#allocation2] sm:$0x3] %vm986, %v978
    %988 = vst.msk [vmem:[#allocation2 + $0x2] sm:$0x3] %vm986, %v979
    %989 = vst.msk [vmem:[#allocation2 + $0x4] sm:$0x3] %vm986, %v980
    %990 = vst.msk [vmem:[#allocation2 + $0x6] sm:$0x3] %vm986, %v981
    %991 = vst.msk [vmem:[#allocation2 + $0x8] sm:$0x3] %vm986, %v982
    %992 = vst.msk [vmem:[#allocation2 + $0xa] sm:$0x3] %vm986, %v983
    %993 = vst.msk [vmem:[#allocation2 + $0xc] sm:$0x3] %vm986, %v984
    %994 = vst.msk [vmem:[#allocation2 + $0xe] sm:$0x3] %vm986, %v985
    %v995 = vld [vmem:[#allocation2] sm:$0x1]
    %v996 = vld [vmem:[#allocation2 + $0x2] sm:$0x1]
    %v997 = vld [vmem:[#allocation2 + $0x4] sm:$0x1]
    %v998 = vld [vmem:[#allocation2 + $0x6] sm:$0x1]
    %v999 = vld [vmem:[#allocation2 + $0x8] sm:$0x1]
    %v1000 = vld [vmem:[#allocation2 + $0xa] sm:$0x1]
    %v1001 = vld [vmem:[#allocation2 + $0xc] sm:$0x1]
    %v1002 = vld [vmem:[#allocation2 + $0xe] sm:$0x1]
    %v1011 = vrot.slane %v996, 7
    %vm1012 = vcmask 1041409
    %v1013 = vsel %vm1012, %v1011, %v995
    %v1014 = vrot.slane %v997, 6
    %vm1015 = vcmask 1042434
    %v1016 = vsel %vm1015, %v1014, %v1013
    %v1017 = vrot.slane %v998, 5
    %vm1018 = vcmask 1043459
    %v1019 = vsel %vm1018, %v1017, %v1016
    %v1020 = vrot.slane %v999, 4
    %vm1021 = vcmask 1044484
    %v1022 = vsel %vm1021, %v1020, %v1019
    %v1023 = vrot.slane %v1000, 3
    %vm1024 = vcmask 1045509
    %v1025 = vsel %vm1024, %v1023, %v1022
    %v1026 = vrot.slane %v1001, 2
    %vm1027 = vcmask 1046534
    %v1028 = vsel %vm1027, %v1026, %v1025
    %v1029 = vrot.slane %v1002, 1
    %vm1030 = vcmask 1047559
    %v1031 = vsel %vm1030, %v1029, %v1028
    %1033 = vst.msk [vmem:[#allocation7] sm:$0xff] %vm297, %v1031
    %v1034 = vld [vmem:[#allocation2 + $0x1] sm:$0x1]
    %v1035 = vld [vmem:[#allocation2 + $0x3] sm:$0x1]
    %v1036 = vld [vmem:[#allocation2 + $0x5] sm:$0x1]
    %v1037 = vld [vmem:[#allocation2 + $0x7] sm:$0x1]
    %v1038 = vld [vmem:[#allocation2 + $0x9] sm:$0x1]
    %v1039 = vld [vmem:[#allocation2 + $0xb] sm:$0x1]
    %v1040 = vld [vmem:[#allocation2 + $0xd] sm:$0x1]
    %v1041 = vld [vmem:[#allocation2 + $0xf] sm:$0x1]
    %v1050 = vrot.slane %v1035, 7
    %v1051 = vsel %vm1012, %v1050, %v1034
    %v1052 = vrot.slane %v1036, 6
    %v1053 = vsel %vm1015, %v1052, %v1051
    %v1054 = vrot.slane %v1037, 5
    %v1055 = vsel %vm1018, %v1054, %v1053
    %v1056 = vrot.slane %v1038, 4
    %v1057 = vsel %vm1021, %v1056, %v1055
    %v1058 = vrot.slane %v1039, 3
    %v1059 = vsel %vm1024, %v1058, %v1057
    %v1060 = vrot.slane %v1040, 2
    %v1061 = vsel %vm1027, %v1060, %v1059
    %v1062 = vrot.slane %v1041, 1
    %v1063 = vsel %vm1030, %v1062, %v1061
    %1064 = vrot.lane.b32.xlu0 %v1063, 16
    %v1065 = vpop.permute.xlu0 %1064
    %vm1067 = vcmask 261248
    %1068 = vst.msk [vmem:[#allocation7] sm:$0xff] %vm1067, %v1065
    %v1069 = vld [vmem:[%s4] sm:$0xff]
    %v1070 = vld [vmem:[#allocation7] sm:$0xff]
    %v1071 = vld [vmem:[%s5] sm:$0xff]
    %1073 = vset.pattern.permute.xlu0 0
    %1074 = vperm.xlu0 %1073, %v1071
    %v1075 = vpop.permute.xlu0 %1074
    %vm1077 = vcmask 64512
    %v1079 = vsel %vm1077, %v1069, 0
    %1081 = vmatprep.subr.mxu0 0.0
    %1082 = vmatpush1.msra.mxu0 %v1070
    %1083 = vmatprep.subr.mxu0 0.0
    %1084 = vmatpush1.msra.mxu0 0.0
    %1085 = vmatprep.subr.mxu0 0.0
    %1086 = vmatpush1.msra.mxu0 0.0
    %1087 = vmatprep.subr.mxu0 0.0
    %1088 = vmatpush1.msra.mxu0 0.0
    %1089 = vmatprep.subr.mxu0 0.0
    %1090 = vmatpush1.msra.mxu0 0.0
    %1091 = vmatprep.subr.mxu0 0.0
    %1092 = vmatpush1.msra.mxu0 0.0
    %1093 = vmatprep.subr.mxu0 0.0
    %1094 = vmatpush1.msra.mxu0 0.0
    %1095 = vmatprep.subr.mxu0 0.0
    %1096 = vmatpush1.msra.mxu0 0.0
    %1097 = vmatprep.subr.mxu0 0.0
    %1098 = vmatpush1.msra.mxu0 0.0
    %1099 = vmatprep.subr.mxu0 0.0
    %1100 = vmatpush1.msra.mxu0 0.0
    %1101 = vmatprep.subr.mxu0 0.0
    %1102 = vmatpush1.msra.mxu0 0.0
    %1103 = vmatprep.subr.mxu0 0.0
    %1104 = vmatpush1.msra.mxu0 0.0
    %1105 = vmatprep.subr.mxu0 0.0
    %1106 = vmatpush1.msra.mxu0 0.0
    %1107 = vmatprep.subr.mxu0 0.0
    %1108 = vmatpush1.msra.mxu0 0.0
    %1109 = vmatprep.subr.mxu0 0.0
    %1110 = vmatpush1.msra.mxu0 0.0
    %1111 = vmatprep.subr.mxu0 0.0
    %1112 = vmatpush1.msra.mxu0 0.0
    %1113 = vmatprep.subr.mxu0 0.0
    %1114 = vmatpush1.msra.mxu0 0.0
    %1115 = vmatprep.subr.mxu0 0.0
    %1116 = vmatpush1.msra.mxu0 0.0
    %1117 = vmatprep.subr.mxu0 0.0
    %1118 = vmatpush1.msra.mxu0 0.0
    %1119 = vmatprep.subr.mxu0 0.0
    %1120 = vmatpush1.msra.mxu0 0.0
    %1121 = vmatprep.subr.mxu0 0.0
    %1122 = vmatpush1.msra.mxu0 0.0
    %1123 = vmatprep.subr.mxu0 0.0
    %1124 = vmatpush1.msra.mxu0 0.0
    %1125 = vmatprep.subr.mxu0 0.0
    %1126 = vmatpush1.msra.mxu0 0.0
    %1127 = vmatprep.subr.mxu0 0.0
    %1128 = vmatpush1.msra.mxu0 0.0
    %1129 = vmatprep.subr.mxu0 0.0
    %1130 = vmatpush1.msra.mxu0 0.0
    %1131 = vmatprep.subr.mxu0 0.0
    %1132 = vmatpush1.msra.mxu0 0.0
    %1133 = vmatprep.subr.mxu0 0.0
    %1134 = vmatpush1.msra.mxu0 0.0
    %1135 = vmatprep.subr.mxu0 0.0
    %1136 = vmatpush1.msra.mxu0 0.0
    %1137 = vmatprep.subr.mxu0 0.0
    %1138 = vmatpush1.msra.mxu0 0.0
    %1139 = vmatprep.subr.mxu0 0.0
    %1140 = vmatpush1.msra.mxu0 0.0
    %1141 = vmatprep.subr.mxu0 0.0
    %1142 = vmatpush1.msra.mxu0 0.0
    %1143 = vmatprep.subr.mxu0 0.0
    %1144 = vmatpush1.msra.mxu0 0.0
    %1145 = vmatprep.mubr.f32.mxu0 0.0
    %1146 = vmatmul.mubr.f32.gmra.mrb[0].mxu0 %v1079
    %v1147 = vpop.f32.mrb[0].mxu0
    %v1148 = vadd.f32 %v1075, %v1147
    %v1149 = vpop.f32.mrb[0].mxu0
    %1150 = vdwg.mxu0
    %v1151 = vadd.f32 %v1148, %v139
    %vm1152 = vcmask 261120
    %1153 = vst.msk [vmem:[#allocation6] sm:$0xff] %vm1152, %v1151
    // Predicated region
    $region30: #{tpu_custom_call.1} parent=1 // pred_check
      _
    $region31: #{tpu_custom_call.1} parent=1 // pred_check_branch
      %1155 = sbr.rel (0) target = $region33
    $region32: #{tpu_custom_call.1} parent=1 // pred_region
      %s1157 = ssub.s32 128, 128
      %1158 = vsyncadd [#allocation5], %s1157
      %s1160 = sshll.u32 [#allocation6], 4
      %s1161 = int_to_ptr.vmem [resolvable:$true] %s1160
      %1163 = dma.vmem_to_hbm [thread:$0]  %s1161, 128, %s6, [#allocation5]
    $region33: #{tpu_custom_call.1} parent=1 // pred_fallthru
      _
    // Predicated region
    $region34: #{tpu_custom_call.1} parent=1 // pred_check
      _
    $region35: #{tpu_custom_call.1} parent=1 // pred_check_branch
      %1165 = sbr.rel (0) target = $region37
    $region36: #{tpu_custom_call.1} parent=1 // pred_region
      %s1167 = ssub.s32 128, 128
      %1168 = vsyncadd [#allocation8], %s1167
      %s1170 = sshll.u32 [#allocation7], 4
      %s1171 = int_to_ptr.vmem [resolvable:$true] %s1170
      %1173 = dma.vmem_to_hbm [thread:$0]  %s1171, 128, %s7, [#allocation8]
    $region37: #{tpu_custom_call.1} parent=1 // pred_fallthru
      _
    // Predicated region
    $region38: #{tpu_custom_call.1} parent=1 // pred_check
      _
    $region39: #{tpu_custom_call.1} parent=1 // pred_check_branch
      %1175 = sbr.rel (0) target = $region41
    $region40: #{tpu_custom_call.1} parent=1 // pred_region
      %1176 = dma.done [#allocation5], 128
    $region41: #{tpu_custom_call.1} parent=1 // pred_fallthru
      _
    // Predicated region
    $region42: #{tpu_custom_call.1} parent=1 // pred_check
      _
    $region43: #{tpu_custom_call.1} parent=1 // pred_check_branch
      %1178 = sbr.rel (0) target = $region45
    $region44: #{tpu_custom_call.1} parent=1 // pred_region
      %1179 = dma.done [#allocation8], 128
    $region45: #{tpu_custom_call.1} parent=1 // pred_fallthru
      _
    %1180 = vsyncpa [#allocation4], 1
    %1181 = vsyncpa [#allocation5], 1
    %1182 = vsyncpa [#allocation8], 1

</llo_original>
